<compile_context>
chip_gen: v5e
topology: v5e:2x2
jax: 0.10.0
libtpu: 0.0.40
codegen_flags: <defaults>
</compile_context>

<pallas_src>
import functools

import jax
import jax.numpy as jnp
import numpy as np
from jax.experimental import pallas as pl
from jax.experimental.pallas import tpu as pltpu

_BF16 = jnp.bfloat16
_F32 = jnp.float32


def _net_kernel(x_ref, fw_ref, fb_ref, *rest, num_rec):
    rw_refs = rest[0:num_rec]
    rb_refs = rest[num_rec:2 * num_rec]
    hw_ref = rest[2 * num_rec]
    hb_ref = rest[2 * num_rec + 1]
    o_ref = rest[2 * num_rec + 2]

    # ---- first ConvBlock (conv + folded fixed-BN + relu): one bf16 MXU matmul,
    # f32 accumulation, bias + relu in f32.
    h = jnp.dot(x_ref[...], fw_ref[...], preferred_element_type=jnp.float32)
    h = jnp.maximum(h + fb_ref[...], 0.0)

    # ---- recurrent ConvBlock, `num_rec` times.  Shared conv weights were
    # block-diag expanded per step (shrinking length), so each step is exactly
    # one MXU matmul + bias + relu.
    for s in range(num_rec):
        h = jnp.dot(h.astype(_BF16), rw_refs[s][...],
                    preferred_element_type=jnp.float32)
        h = jnp.maximum(h + rb_refs[s][...], 0.0)

    # ---- head: final length == 1 -> flatten is a no-op; Linear(W, O_pad),
    # lane-dense padded output (unmasked vst).
    o_ref[...] = (jnp.dot(h.astype(_BF16), hw_ref[...],
                          preferred_element_type=jnp.float32)
                  + hb_ref[...])


def _round_up(v, m):
    return ((v + m - 1) // m) * m


def _choose_batch_tile(n):
    """Batch tile: <=1024 rows, multiple of 8, >=2 grid blocks when possible."""
    n8 = _round_up(n, 8)
    nblocks = max(1, -(-n8 // 1024))      # keep the tile at <= 1024 rows
    if n8 >= 16:
        nblocks = max(nblocks, 2)         # v7x: feed both TensorCores
    return _round_up(-(-n8 // nblocks), 8)


def _block_diag_tiles(block, n):
    """(r, c) block -> (n*r, n*c) block-diagonal matrix with n copies."""
    r, c = block.shape
    eye = jnp.eye(n, dtype=block.dtype)
    return (eye[:, None, :, None] * block[None, :, None, :]).reshape(n * r, n * c)


def prepare_weights(params, *, num=4, in_length=32):
    """One-time preprocessing: BN folding, block-diag expansion, padding, bf16 cast."""
    L0 = in_length
    L1 = L0 // 2
    W = params["first_w"].shape[0]
    O = params["head_w"].shape[0]
    assert L1 == 2 ** num, "input length must satisfy L0 == 2 ** (num + 1)"

    fs = params["first_scale"].astype(_F32)
    ft = params["first_shift"].astype(_F32)
    rs = params["rec_scale"].astype(_F32)
    rt = params["rec_shift"].astype(_F32)

    # ---- first conv: taps as rows of a (2, W) block; BN scale folded into
    # columns, BN shift folded into the bias.
    k2 = jnp.transpose(params["first_w"][:, 0, :]).astype(_F32) * fs[None, :]   # (2, W)
    fw_big = _block_diag_tiles(k2, L1).astype(_BF16)                            # (L0, L1*W)
    fb_fold = params["first_b"].astype(_F32) * fs + ft
    fb_big = jnp.tile(fb_fold, L1)[None, :]                                     # (1, L1*W)

    # ---- recurrent conv: fuse even/odd taps into (2W, W), fold BN, then
    # block-diag expand per step (shared weights, shrinking length).
    w_fused = jnp.concatenate(
        [jnp.transpose(params["rec_w"][:, :, 0]).astype(_F32),
         jnp.transpose(params["rec_w"][:, :, 1]).astype(_F32)], axis=0) * rs[None, :]
    rb_fold = params["rec_b"].astype(_F32) * rs + rt
    rw_list, rb_list = [], []
    l_out = L1 // 2
    for _ in range(num):
        rw_list.append(_block_diag_tiles(w_fused, l_out).astype(_BF16))   # (2*l*W, l*W)
        rb_list.append(jnp.tile(rb_fold, l_out)[None, :])                 # (1, l*W)
        l_out //= 2

    # ---- head: Linear(W, O), padded to a lane-dense 128-multiple output.
    O_pad = _round_up(O, 128)
    hw_pad = jnp.zeros((W, O_pad), _F32).at[:, :O].set(
        jnp.transpose(params["head_w"]).astype(_F32)).astype(_BF16)
    hb_pad = jnp.zeros((1, O_pad), _F32).at[:, :O].set(
        params["head_b"].astype(_F32)[None, :])

    w_args = [fw_big, fb_big] + rw_list + rb_list + [hw_pad, hb_pad]
    meta = dict(num=num, L0=L0, O=O, O_pad=O_pad)
    return w_args, meta


def mnist1d_recurrent_convnet(x, w_args, meta):
    """x: (N, L0) float.  Returns (N, out_channels) float32."""
    num, L0, O, O_pad = meta["num"], meta["L0"], meta["O"], meta["O_pad"]
    N = x.shape[0]
    assert x.shape[1] == L0

    # ---- batch tiling: pad N to a multiple of the tile (no divisibility req.)
    bn = _choose_batch_tile(N)
    N_pad = _round_up(N, bn)
    xf = x.astype(_BF16)
    if N_pad != N:
        xf = jnp.zeros((N_pad, L0), _BF16).at[:N].set(xf)
    grid = (N_pad // bn,)

    in_specs = [pl.BlockSpec((bn, L0), lambda i: (i, 0))]
    # Grid-invariant weights/biases: single-buffered (no pointless rotation).
    in_specs += [pl.BlockSpec(a.shape, lambda i: (0, 0),
                              pipeline_mode=pl.Buffered(1)) for a in w_args]

    out = pl.pallas_call(
        functools.partial(_net_kernel, num_rec=num),
        out_shape=jax.ShapeDtypeStruct((N_pad, O_pad), _F32),
        grid_spec=pltpu.PrefetchScalarGridSpec(
            num_scalar_prefetch=0,
            grid=grid,
            in_specs=in_specs,
            out_specs=pl.BlockSpec((bn, O_pad), lambda i: (i, 0)),
        ),
        compiler_params=pltpu.CompilerParams(
            dimension_semantics=("parallel",),
            vmem_limit_bytes=48 * 1024 * 1024,
        ),
    )(xf, *w_args)
    return out[:N, :O]


def reference_forward(x, params, *, num=4):
    """Pure-JAX f32 reference mirroring the PyTorch forward (NCL conv)."""
    def block(h, w, b, s, t):
        y = jax.lax.conv_general_dilated(
            h, w, window_strides=(2,), padding="VALID",
            dimension_numbers=("NCH", "OIH", "NCH"))
        y = (y + b[None, :, None]) * s[None, :, None] + t[None, :, None]
        return jnp.maximum(y, 0.0)

    h = x[:, None, :]                                   # unsqueeze(1)
    h = block(h, params["first_w"], params["first_b"],
              params["first_scale"], params["first_shift"])
    for _ in range(num):
        h = block(h, params["rec_w"], params["rec_b"],
                  params["rec_scale"], params["rec_shift"])
    h = h.reshape(h.shape[0], -1)                       # flatten
    return h @ params["head_w"].T + params["head_b"]


if __name__ == "__main__":
    N, L0, WIDTH, OUT, NUM = 4, 32, 32, 10, 4   # small shapes; L0 = 2**(NUM+1)

    key = jax.random.PRNGKey(0)
    ks = jax.random.split(key, 9)

    eps = 1e-5
    # Frozen ("fixed") batchnorm statistics, gamma=1 / beta=0 (PyTorch defaults),
    # synthetic deterministic running mean / var.
    run_mean = 0.1 * jax.random.normal(ks[7], (WIDTH,), jnp.float32)
    run_var = 0.75 + 0.5 * jnp.abs(jax.random.normal(ks[8], (WIDTH,), jnp.float32))
    bn_scale = 1.0 / jnp.sqrt(run_var + eps)            # gamma / sqrt(var + eps)
    bn_shift = -run_mean * bn_scale                     # beta - mean * scale

    params = {
        "first_w": 0.5 * jax.random.normal(ks[0], (WIDTH, 1, 2), jnp.float32),
        "first_b": 0.1 * jax.random.normal(ks[1], (WIDTH,), jnp.float32),
        "first_scale": bn_scale,
        "first_shift": bn_shift,
        "rec_w": (1.0 / jnp.sqrt(2.0 * WIDTH))
                 * jax.random.normal(ks[2], (WIDTH, WIDTH, 2), jnp.float32),
        "rec_b": 0.1 * jax.random.normal(ks[3], (WIDTH,), jnp.float32),
        "rec_scale": bn_scale,
        "rec_shift": bn_shift,
        "head_w": (1.0 / jnp.sqrt(WIDTH))
                  * jax.random.normal(ks[4], (OUT, WIDTH), jnp.float32),
        "head_b": 0.1 * jax.random.normal(ks[5], (OUT,), jnp.float32),
    }

    x = jax.random.normal(ks[6], (N, L0), jnp.float32)

    # Weight preprocessing hoisted out of the per-call path (run once).
    w_args, meta = prepare_weights(params, num=NUM, in_length=L0)

    out = jax.block_until_ready(mnist1d_recurrent_convnet(x, w_args, meta))
    ref = reference_forward(x, params, num=NUM)
    # bf16 MXU operands -> looser tolerance than the f32 reference.
    np.testing.assert_allclose(np.asarray(out), np.asarray(ref), rtol=5e-2, atol=5e-2)

    print("KERNEL_OK")
</pallas_src>

<mosaic_0001>
module attributes {stable_mosaic.version = 11 : i64} {
  func.func @_net_kernel(%arg0: i32, %arg1: memref<8x32xbf16, #tpu.memory_space<vmem>>, %arg2: memref<32x512xbf16, #tpu.memory_space<vmem>>, %arg3: memref<1x512xf32, #tpu.memory_space<vmem>>, %arg4: memref<512x256xbf16, #tpu.memory_space<vmem>>, %arg5: memref<256x128xbf16, #tpu.memory_space<vmem>>, %arg6: memref<128x64xbf16, #tpu.memory_space<vmem>>, %arg7: memref<64x32xbf16, #tpu.memory_space<vmem>>, %arg8: memref<1x256xf32, #tpu.memory_space<vmem>>, %arg9: memref<1x128xf32, #tpu.memory_space<vmem>>, %arg10: memref<1x64xf32, #tpu.memory_space<vmem>>, %arg11: memref<1x32xf32, #tpu.memory_space<vmem>>, %arg12: memref<32x128xbf16, #tpu.memory_space<vmem>>, %arg13: memref<1x128xf32, #tpu.memory_space<vmem>>, %arg14: memref<8x128xf32, #tpu.memory_space<vmem>>) attributes {dimension_semantics = [#tpu.dimension_semantics<parallel>], iteration_bounds = array<i64: 1>, scalar_prefetch = 0 : i64, scratch_operands = 0 : i64, tpu.core_type = #tpu.core_type<tc>, window_params = [{transform_indices = @transform_0, window_bounds = array<i64: 8, 32>}, {pipeline_mode = #tpu.pipeline_mode<synchronous>, transform_indices = @transform_1, window_bounds = array<i64: 32, 512>}, {pipeline_mode = #tpu.pipeline_mode<synchronous>, transform_indices = @transform_2, window_bounds = array<i64: 1, 512>}, {pipeline_mode = #tpu.pipeline_mode<synchronous>, transform_indices = @transform_3, window_bounds = array<i64: 512, 256>}, {pipeline_mode = #tpu.pipeline_mode<synchronous>, transform_indices = @transform_4, window_bounds = array<i64: 256, 128>}, {pipeline_mode = #tpu.pipeline_mode<synchronous>, transform_indices = @transform_5, window_bounds = array<i64: 128, 64>}, {pipeline_mode = #tpu.pipeline_mode<synchronous>, transform_indices = @transform_6, window_bounds = array<i64: 64, 32>}, {pipeline_mode = #tpu.pipeline_mode<synchronous>, transform_indices = @transform_7, window_bounds = array<i64: 1, 256>}, {pipeline_mode = #tpu.pipeline_mode<synchronous>, transform_indices = @transform_8, window_bounds = array<i64: 1, 128>}, {pipeline_mode = #tpu.pipeline_mode<synchronous>, transform_indices = @transform_9, window_bounds = array<i64: 1, 64>}, {pipeline_mode = #tpu.pipeline_mode<synchronous>, transform_indices = @transform_10, window_bounds = array<i64: 1, 32>}, {pipeline_mode = #tpu.pipeline_mode<synchronous>, transform_indices = @transform_11, window_bounds = array<i64: 32, 128>}, {pipeline_mode = #tpu.pipeline_mode<synchronous>, transform_indices = @transform_12, window_bounds = array<i64: 1, 128>}, {transform_indices = @transform_13, window_bounds = array<i64: 8, 128>}]} {
    %c0 = arith.constant 0 : index
    %c0_0 = arith.constant 0 : index
    %0 = vector.load %arg1[%c0, %c0_0] : memref<8x32xbf16, #tpu.memory_space<vmem>>, vector<8x32xbf16>
    %c0_1 = arith.constant 0 : index
    %c0_2 = arith.constant 0 : index
    %1 = vector.load %arg2[%c0_1, %c0_2] : memref<32x512xbf16, #tpu.memory_space<vmem>>, vector<32x512xbf16>
    %cst = arith.constant dense<0.000000e+00> : vector<8x512xf32>
    %2 = tpu.matmul %0, %1, %cst {dimension_numbers = #tpu.dot_dimension_numbers<[1], [0], [0], [1], [0, 0, 1, 1], [], []>} : vector<8x32xbf16>, vector<32x512xbf16>, vector<8x512xf32> -> vector<8x512xf32>
    %c0_3 = arith.constant 0 : index
    %c0_4 = arith.constant 0 : index
    %3 = vector.load %arg3[%c0_3, %c0_4] : memref<1x512xf32, #tpu.memory_space<vmem>>, vector<1x512xf32>
    %4 = vector.broadcast %3 : vector<1x512xf32> to vector<8x512xf32>
    %5 = arith.addf %2, %4 : vector<8x512xf32>
    %cst_5 = arith.constant 0.000000e+00 : f32
    %6 = vector.broadcast %cst_5 : f32 to vector<8x512xf32>
    %7 = arith.maximumf %5, %6 : vector<8x512xf32>
    %8 = arith.truncf %7 : vector<8x512xf32> to vector<8x512xbf16>
    %c0_6 = arith.constant 0 : index
    %c0_7 = arith.constant 0 : index
    %9 = vector.load %arg4[%c0_6, %c0_7] : memref<512x256xbf16, #tpu.memory_space<vmem>>, vector<512x256xbf16>
    %cst_8 = arith.constant dense<0.000000e+00> : vector<8x256xf32>
    %10 = tpu.matmul %8, %9, %cst_8 {dimension_numbers = #tpu.dot_dimension_numbers<[1], [0], [0], [1], [0, 0, 1, 1], [], []>} : vector<8x512xbf16>, vector<512x256xbf16>, vector<8x256xf32> -> vector<8x256xf32>
    %c0_9 = arith.constant 0 : index
    %c0_10 = arith.constant 0 : index
    %11 = vector.load %arg8[%c0_9, %c0_10] : memref<1x256xf32, #tpu.memory_space<vmem>>, vector<1x256xf32>
    %12 = vector.broadcast %11 : vector<1x256xf32> to vector<8x256xf32>
    %13 = arith.addf %10, %12 : vector<8x256xf32>
    %cst_11 = arith.constant 0.000000e+00 : f32
    %14 = vector.broadcast %cst_11 : f32 to vector<8x256xf32>
    %15 = arith.maximumf %13, %14 : vector<8x256xf32>
    %16 = arith.truncf %15 : vector<8x256xf32> to vector<8x256xbf16>
    %c0_12 = arith.constant 0 : index
    %c0_13 = arith.constant 0 : index
    %17 = vector.load %arg5[%c0_12, %c0_13] : memref<256x128xbf16, #tpu.memory_space<vmem>>, vector<256x128xbf16>
    %cst_14 = arith.constant dense<0.000000e+00> : vector<8x128xf32>
    %18 = tpu.matmul %16, %17, %cst_14 {dimension_numbers = #tpu.dot_dimension_numbers<[1], [0], [0], [1], [0, 0, 1, 1], [], []>} : vector<8x256xbf16>, vector<256x128xbf16>, vector<8x128xf32> -> vector<8x128xf32>
    %c0_15 = arith.constant 0 : index
    %c0_16 = arith.constant 0 : index
    %19 = vector.load %arg9[%c0_15, %c0_16] : memref<1x128xf32, #tpu.memory_space<vmem>>, vector<1x128xf32>
    %20 = vector.broadcast %19 : vector<1x128xf32> to vector<8x128xf32>
    %21 = arith.addf %18, %20 : vector<8x128xf32>
    %cst_17 = arith.constant 0.000000e+00 : f32
    %22 = vector.broadcast %cst_17 : f32 to vector<8x128xf32>
    %23 = arith.maximumf %21, %22 : vector<8x128xf32>
    %24 = arith.truncf %23 : vector<8x128xf32> to vector<8x128xbf16>
    %c0_18 = arith.constant 0 : index
    %c0_19 = arith.constant 0 : index
    %25 = vector.load %arg6[%c0_18, %c0_19] : memref<128x64xbf16, #tpu.memory_space<vmem>>, vector<128x64xbf16>
    %cst_20 = arith.constant dense<0.000000e+00> : vector<8x64xf32>
    %26 = tpu.matmul %24, %25, %cst_20 {dimension_numbers = #tpu.dot_dimension_numbers<[1], [0], [0], [1], [0, 0, 1, 1], [], []>} : vector<8x128xbf16>, vector<128x64xbf16>, vector<8x64xf32> -> vector<8x64xf32>
    %c0_21 = arith.constant 0 : index
    %c0_22 = arith.constant 0 : index
    %27 = vector.load %arg10[%c0_21, %c0_22] : memref<1x64xf32, #tpu.memory_space<vmem>>, vector<1x64xf32>
    %28 = vector.broadcast %27 : vector<1x64xf32> to vector<8x64xf32>
    %29 = arith.addf %26, %28 : vector<8x64xf32>
    %cst_23 = arith.constant 0.000000e+00 : f32
    %30 = vector.broadcast %cst_23 : f32 to vector<8x64xf32>
    %31 = arith.maximumf %29, %30 : vector<8x64xf32>
    %32 = arith.truncf %31 : vector<8x64xf32> to vector<8x64xbf16>
    %c0_24 = arith.constant 0 : index
    %c0_25 = arith.constant 0 : index
    %33 = vector.load %arg7[%c0_24, %c0_25] : memref<64x32xbf16, #tpu.memory_space<vmem>>, vector<64x32xbf16>
    %cst_26 = arith.constant dense<0.000000e+00> : vector<8x32xf32>
    %34 = tpu.matmul %32, %33, %cst_26 {dimension_numbers = #tpu.dot_dimension_numbers<[1], [0], [0], [1], [0, 0, 1, 1], [], []>} : vector<8x64xbf16>, vector<64x32xbf16>, vector<8x32xf32> -> vector<8x32xf32>
    %c0_27 = arith.constant 0 : index
    %c0_28 = arith.constant 0 : index
    %35 = vector.load %arg11[%c0_27, %c0_28] : memref<1x32xf32, #tpu.memory_space<vmem>>, vector<1x32xf32>
    %36 = vector.broadcast %35 : vector<1x32xf32> to vector<8x32xf32>
    %37 = arith.addf %34, %36 : vector<8x32xf32>
    %cst_29 = arith.constant 0.000000e+00 : f32
    %38 = vector.broadcast %cst_29 : f32 to vector<8x32xf32>
    %39 = arith.maximumf %37, %38 : vector<8x32xf32>
    %40 = arith.truncf %39 : vector<8x32xf32> to vector<8x32xbf16>
    %c0_30 = arith.constant 0 : index
    %c0_31 = arith.constant 0 : index
    %41 = vector.load %arg12[%c0_30, %c0_31] : memref<32x128xbf16, #tpu.memory_space<vmem>>, vector<32x128xbf16>
    %cst_32 = arith.constant dense<0.000000e+00> : vector<8x128xf32>
    %42 = tpu.matmul %40, %41, %cst_32 {dimension_numbers = #tpu.dot_dimension_numbers<[1], [0], [0], [1], [0, 0, 1, 1], [], []>} : vector<8x32xbf16>, vector<32x128xbf16>, vector<8x128xf32> -> vector<8x128xf32>
    %c0_33 = arith.constant 0 : index
    %c0_34 = arith.constant 0 : index
    %43 = vector.load %arg13[%c0_33, %c0_34] : memref<1x128xf32, #tpu.memory_space<vmem>>, vector<1x128xf32>
    %44 = vector.broadcast %43 : vector<1x128xf32> to vector<8x128xf32>
    %45 = arith.addf %42, %44 : vector<8x128xf32>
    %c0_35 = arith.constant 0 : index
    %c0_36 = arith.constant 0 : index
    %46 = vector.load %arg14[%c0_35, %c0_36] : memref<8x128xf32, #tpu.memory_space<vmem>>, vector<8x128xf32>
    tpu.vector_store %arg14[%c0_35, %c0_36], %45 {strides = array<i32>} : memref<8x128xf32, #tpu.memory_space<vmem>>, vector<8x128xf32>,
    return
  }
  func.func @transform_0(%arg0: i32) -> (i32, i32) {
    %c0_i32 = arith.constant 0 : i32
    %c0_i32_0 = arith.constant 0 : i32
    return %arg0, %c0_i32 : i32, i32
  }
  func.func @transform_1(%arg0: i32) -> (i32, i32) {
    %c0_i32 = arith.constant 0 : i32
    %c0_i32_0 = arith.constant 0 : i32
    %c0_i32_1 = arith.constant 0 : i32
    return %c0_i32, %c0_i32_0 : i32, i32
  }
  func.func @transform_2(%arg0: i32) -> (i32, i32) {
    %c0_i32 = arith.constant 0 : i32
    %c0_i32_0 = arith.constant 0 : i32
    %c0_i32_1 = arith.constant 0 : i32
    return %c0_i32, %c0_i32_0 : i32, i32
  }
  func.func @transform_3(%arg0: i32) -> (i32, i32) {
    %c0_i32 = arith.constant 0 : i32
    %c0_i32_0 = arith.constant 0 : i32
    %c0_i32_1 = arith.constant 0 : i32
    return %c0_i32, %c0_i32_0 : i32, i32
  }
  func.func @transform_4(%arg0: i32) -> (i32, i32) {
    %c0_i32 = arith.constant 0 : i32
    %c0_i32_0 = arith.constant 0 : i32
    %c0_i32_1 = arith.constant 0 : i32
    return %c0_i32, %c0_i32_0 : i32, i32
  }
  func.func @transform_5(%arg0: i32) -> (i32, i32) {
    %c0_i32 = arith.constant 0 : i32
    %c0_i32_0 = arith.constant 0 : i32
    %c0_i32_1 = arith.constant 0 : i32
    return %c0_i32, %c0_i32_0 : i32, i32
  }
  func.func @transform_6(%arg0: i32) -> (i32, i32) {
    %c0_i32 = arith.constant 0 : i32
    %c0_i32_0 = arith.constant 0 : i32
    %c0_i32_1 = arith.constant 0 : i32
    return %c0_i32, %c0_i32_0 : i32, i32
  }
  func.func @transform_7(%arg0: i32) -> (i32, i32) {
    %c0_i32 = arith.constant 0 : i32
    %c0_i32_0 = arith.constant 0 : i32
    %c0_i32_1 = arith.constant 0 : i32
    return %c0_i32, %c0_i32_0 : i32, i32
  }
  func.func @transform_8(%arg0: i32) -> (i32, i32) {
    %c0_i32 = arith.constant 0 : i32
    %c0_i32_0 = arith.constant 0 : i32
    %c0_i32_1 = arith.constant 0 : i32
    return %c0_i32, %c0_i32_0 : i32, i32
  }
  func.func @transform_9(%arg0: i32) -> (i32, i32) {
    %c0_i32 = arith.constant 0 : i32
    %c0_i32_0 = arith.constant 0 : i32
    %c0_i32_1 = arith.constant 0 : i32
    return %c0_i32, %c0_i32_0 : i32, i32
  }
  func.func @transform_10(%arg0: i32) -> (i32, i32) {
    %c0_i32 = arith.constant 0 : i32
    %c0_i32_0 = arith.constant 0 : i32
    %c0_i32_1 = arith.constant 0 : i32
    return %c0_i32, %c0_i32_0 : i32, i32
  }
  func.func @transform_11(%arg0: i32) -> (i32, i32) {
    %c0_i32 = arith.constant 0 : i32
    %c0_i32_0 = arith.constant 0 : i32
    %c0_i32_1 = arith.constant 0 : i32
    return %c0_i32, %c0_i32_0 : i32, i32
  }
  func.func @transform_12(%arg0: i32) -> (i32, i32) {
    %c0_i32 = arith.constant 0 : i32
    %c0_i32_0 = arith.constant 0 : i32
    %c0_i32_1 = arith.constant 0 : i32
    return %c0_i32, %c0_i32_0 : i32, i32
  }
  func.func @transform_13(%arg0: i32) -> (i32, i32) {
    %c0_i32 = arith.constant 0 : i32
    %c0_i32_0 = arith.constant 0 : i32
    return %arg0, %c0_i32 : i32, i32
  }
}

</mosaic_0001>

<llo_original>
// kernel: tpu_custom_call.1
$region0: #{tpu_custom_call.1}
  #allocation0 [shape = 'u32[]', space=smem, size = 0x4, offset = 0x4, fixed_abs, tag = 'smem constant byte address 0x4 - core index']
  #allocation1 [shape = 'u32[72,128]{1,0:T(1,128)}', space=vmem, size = 0x9000, scoped, tag = 'internal scratch']
  %s0 = inlined_call_operand.vmem [shape: bf16[8,32], index: 0, kind: input, shape index: {}]
  %s1 = inlined_call_operand.vmem [shape: bf16[32,512], index: 1, kind: input, shape index: {}]
  %s2 = inlined_call_operand.vmem [shape: f32[1,512], index: 2, kind: input, shape index: {}]
  %s3 = inlined_call_operand.hbm [shape: bf16[512,256], index: 3, kind: input, shape index: {}]
  %s4 = inlined_call_operand.hbm [shape: bf16[256,128], index: 4, kind: input, shape index: {}]
  %s5 = inlined_call_operand.vmem [shape: bf16[128,64], index: 5, kind: input, shape index: {}]
  %s6 = inlined_call_operand.vmem [shape: bf16[64,32], index: 6, kind: input, shape index: {}]
  %s7 = inlined_call_operand.vmem [shape: f32[1,256], index: 7, kind: input, shape index: {}]
  %s8 = inlined_call_operand.vmem [shape: f32[1,128], index: 8, kind: input, shape index: {}]
  %s9 = inlined_call_operand.vmem [shape: f32[1,64], index: 9, kind: input, shape index: {}]
  %s10 = inlined_call_operand.vmem [shape: f32[1,32], index: 10, kind: input, shape index: {}]
  %s11 = inlined_call_operand.vmem [shape: bf16[32,128], index: 11, kind: input, shape index: {}]
  %s12 = inlined_call_operand.vmem [shape: f32[1,128], index: 12, kind: input, shape index: {}]
  %s13 = inlined_call_operand.hbm [shape: f32[8,128], index: 13, kind: output, shape index: {}]
  %s14 = sld [smem:[#allocation0]]
  $region70: #{tpu_custom_call.1} parent=0
    _
  %s16 = ssub.s32 1, %s14
  %s17 = scalar_select 0, %s16, %s14
  $region1: #{tpu_custom_call.1} parent=0
    #allocation2 [shape = 'u8[262144]{0}', space=vmem, size = 0x40000, scoped, tag = 'input window, operand 3, single buffered']
    #allocation3 [shape = 's32[1]{0}', space=sflag, size = 0x4, scoped, tag = 'scoped memory for tpu_custom_call.1']
    #allocation4 [shape = 's32[1]{0}', space=sflag, size = 0x4, scoped, tag = 'scoped memory for tpu_custom_call.1']
    #allocation5 [shape = 'u8[65536]{0}', space=vmem, size = 0x10000, scoped, tag = 'input window, operand 4, single buffered']
    #allocation6 [shape = 's32[1]{0}', space=sflag, size = 0x4, scoped, tag = 'scoped memory for tpu_custom_call.1']
    #allocation7 [shape = 'u8[4096]{0}', space=vmem, size = 0x1000, scoped, tag = 'output window, operand 0, single buffered']
    %18 = vsyncpa [#allocation3], 0
    %19 = vsyncpa [#allocation6], 0
    %20 = vsyncpa [#allocation4], 0
    // Predicated region
    $region2: #{tpu_custom_call.1} parent=1 // pred_check
      _
    $region3: #{tpu_custom_call.1} parent=1 // pred_check_branch
      %22 = sbr.rel (0) target = $region5
    $region4: #{tpu_custom_call.1} parent=1 // pred_region
      _
    $region5: #{tpu_custom_call.1} parent=1 // pred_fallthru
      _
    // Predicated region
    $region6: #{tpu_custom_call.1} parent=1 // pred_check
      _
    $region7: #{tpu_custom_call.1} parent=1 // pred_check_branch
      %24 = sbr.rel (0) target = $region9
    $region8: #{tpu_custom_call.1} parent=1 // pred_region
      _
    $region9: #{tpu_custom_call.1} parent=1 // pred_fallthru
      _
    // Predicated region
    $region10: #{tpu_custom_call.1} parent=1 // pred_check
      _
    $region11: #{tpu_custom_call.1} parent=1 // pred_check_branch
      %26 = sbr.rel (0) target = $region13
    $region12: #{tpu_custom_call.1} parent=1 // pred_region
      _
    $region13: #{tpu_custom_call.1} parent=1 // pred_fallthru
      _
    // Predicated region
    $region14: #{tpu_custom_call.1} parent=1 // pred_check
      _
    $region15: #{tpu_custom_call.1} parent=1 // pred_check_branch
      %28 = sbr.rel (0) target = $region17
    $region16: #{tpu_custom_call.1} parent=1 // pred_region
      %30 = vsyncadd [#allocation3], 0
      %s31 = sshll.u32 %s3, 4
      %s32 = int_to_ptr.hbm [resolvable:$true] %s31
      %s33 = sshll.u32 [#allocation2], 4
      %s34 = int_to_ptr.vmem [resolvable:$true] %s33
      %39 = dma.hbm_to_vmem [thread:$0]  %s32, 8192, %s34, [#allocation3], 128, 128, 8
    $region17: #{tpu_custom_call.1} parent=1 // pred_fallthru
      _
    // Predicated region
    $region18: #{tpu_custom_call.1} parent=1 // pred_check
      _
    $region19: #{tpu_custom_call.1} parent=1 // pred_check_branch
      %41 = sbr.rel (0) target = $region21
    $region20: #{tpu_custom_call.1} parent=1 // pred_region
      %43 = vsyncadd [#allocation6], 0
      %s44 = sshll.u32 %s4, 4
      %s45 = int_to_ptr.hbm [resolvable:$true] %s44
      %s46 = sshll.u32 [#allocation5], 4
      %s47 = int_to_ptr.vmem [resolvable:$true] %s46
      %52 = dma.hbm_to_vmem [thread:$0]  %s45, 2048, %s47, [#allocation6], 64, 64, 4
    $region21: #{tpu_custom_call.1} parent=1 // pred_fallthru
      _
    // Predicated region
    $region22: #{tpu_custom_call.1} parent=1 // pred_check
      _
    $region23: #{tpu_custom_call.1} parent=1 // pred_check_branch
      %54 = sbr.rel (0) target = $region25
    $region24: #{tpu_custom_call.1} parent=1 // pred_region
      _
    $region25: #{tpu_custom_call.1} parent=1 // pred_fallthru
      _
    // Predicated region
    $region26: #{tpu_custom_call.1} parent=1 // pred_check
      _
    $region27: #{tpu_custom_call.1} parent=1 // pred_check_branch
      %56 = sbr.rel (0) target = $region29
    $region28: #{tpu_custom_call.1} parent=1 // pred_region
      _
    $region29: #{tpu_custom_call.1} parent=1 // pred_fallthru
      _
    // Predicated region
    $region30: #{tpu_custom_call.1} parent=1 // pred_check
      _
    $region31: #{tpu_custom_call.1} parent=1 // pred_check_branch
      %58 = sbr.rel (0) target = $region33
    $region32: #{tpu_custom_call.1} parent=1 // pred_region
      _
    $region33: #{tpu_custom_call.1} parent=1 // pred_fallthru
      _
    // Predicated region
    $region34: #{tpu_custom_call.1} parent=1 // pred_check
      _
    $region35: #{tpu_custom_call.1} parent=1 // pred_check_branch
      %60 = sbr.rel (0) target = $region37
    $region36: #{tpu_custom_call.1} parent=1 // pred_region
      _
    $region37: #{tpu_custom_call.1} parent=1 // pred_fallthru
      _
    // Predicated region
    $region38: #{tpu_custom_call.1} parent=1 // pred_check
      _
    $region39: #{tpu_custom_call.1} parent=1 // pred_check_branch
      %62 = sbr.rel (0) target = $region41
    $region40: #{tpu_custom_call.1} parent=1 // pred_region
      _
    $region41: #{tpu_custom_call.1} parent=1 // pred_fallthru
      _
    // Predicated region
    $region42: #{tpu_custom_call.1} parent=1 // pred_check
      _
    $region43: #{tpu_custom_call.1} parent=1 // pred_check_branch
      %64 = sbr.rel (0) target = $region45
    $region44: #{tpu_custom_call.1} parent=1 // pred_region
      _
    $region45: #{tpu_custom_call.1} parent=1 // pred_fallthru
      _
    // Predicated region
    $region46: #{tpu_custom_call.1} parent=1 // pred_check
      _
    $region47: #{tpu_custom_call.1} parent=1 // pred_check_branch
      %66 = sbr.rel (0) target = $region49
    $region48: #{tpu_custom_call.1} parent=1 // pred_region
      _
    $region49: #{tpu_custom_call.1} parent=1 // pred_fallthru
      _
    // Predicated region
    $region50: #{tpu_custom_call.1} parent=1 // pred_check
      _
    $region51: #{tpu_custom_call.1} parent=1 // pred_check_branch
      %68 = sbr.rel (0) target = $region53
    $region52: #{tpu_custom_call.1} parent=1 // pred_region
      _
    $region53: #{tpu_custom_call.1} parent=1 // pred_fallthru
      _
    // Predicated region
    $region54: #{tpu_custom_call.1} parent=1 // pred_check
      _
    $region55: #{tpu_custom_call.1} parent=1 // pred_check_branch
      %70 = sbr.rel (0) target = $region57
    $region56: #{tpu_custom_call.1} parent=1 // pred_region
      %72 = dma.done [#allocation3], 8192
    $region57: #{tpu_custom_call.1} parent=1 // pred_fallthru
      _
    // Predicated region
    $region58: #{tpu_custom_call.1} parent=1 // pred_check
      _
    $region59: #{tpu_custom_call.1} parent=1 // pred_check_branch
      %74 = sbr.rel (0) target = $region61
    $region60: #{tpu_custom_call.1} parent=1 // pred_region
      %76 = dma.done [#allocation6], 2048
    $region61: #{tpu_custom_call.1} parent=1 // pred_fallthru
      _
    %v78 = vld [vmem:[%s0] sm:$0xf]
    %v79 = vld [vmem:[%s1] sm:$0xff]
    %v80 = vld [vmem:[%s1 + $0x8] sm:$0xff]
    %v81 = vld [vmem:[%s1 + $0x10] sm:$0xff]
    %v82 = vld [vmem:[%s1 + $0x18] sm:$0xff]
    %v83 = vld [vmem:[%s1 + $0x20] sm:$0xff]
    %v84 = vld [vmem:[%s1 + $0x28] sm:$0xff]
    %v85 = vld [vmem:[%s1 + $0x30] sm:$0xff]
    %v86 = vld [vmem:[%s1 + $0x38] sm:$0xff]
    %v87 = vld [vmem:[%s2] sm:$0xf]
    %v89 = vperm.slane %v87, 0
    %v90 = vperm.slane %v87, 1
    %v91 = vperm.slane %v87, 2
    %v92 = vperm.slane %v87, 3
    %v105 = vunpack.c.l.b16 %v79
    %v106 = vunpack.c.h.b16 %v79
    %v107 = vunpack.c.l.b16 %v80
    %v108 = vunpack.c.h.b16 %v80
    %v109 = vunpack.c.l.b16 %v81
    %v110 = vunpack.c.h.b16 %v81
    %v111 = vunpack.c.l.b16 %v82
    %v112 = vunpack.c.h.b16 %v82
    %v113 = vunpack.c.l.b16 %v83
    %v114 = vunpack.c.h.b16 %v83
    %v115 = vunpack.c.l.b16 %v84
    %v116 = vunpack.c.h.b16 %v84
    %v117 = vunpack.c.l.b16 %v85
    %v118 = vunpack.c.h.b16 %v85
    %v119 = vunpack.c.l.b16 %v86
    %v120 = vunpack.c.h.b16 %v86
    %v121 = vpack.c.b16 %v109, %v105
    %v122 = vpack.c.b16 %v110, %v106
    %v123 = vpack.c.b16 %v111, %v107
    %v124 = vpack.c.b16 %v112, %v108
    %v125 = vpack.c.b16 %v117, %v113
    %v126 = vpack.c.b16 %v118, %v114
    %v127 = vpack.c.b16 %v119, %v115
    %v128 = vpack.c.b16 %v120, %v116
    %vm137 = vcmask 261120
    %v139 = vsel %vm137, %v78, 0
    %141 = vmatpush.bf16.msra.mxu0 0
    %142 = vmatpush.bf16.msra.mxu0 0
    %143 = vmatpush.bf16.msra.mxu0 0
    %144 = vmatpush.bf16.msra.mxu0 0
    %145 = vmatpush.bf16.msra.mxu0 0
    %146 = vmatpush.bf16.msra.mxu0 0
    %147 = vmatpush.bf16.msra.mxu0 %v125
    %148 = vmatpush.bf16.msra.mxu0 %v121
    %149 = vmatmul.bf16.gmra.mxu0 %v139
    %v150 = vpop.f32.mrf.mxu0
    %v151 = vadd.f32 %v89, %v150
    %v152 = vpop.f32.mrf.mxu0
    %153 = vdwg.mxu0
    %154 = vmatpush.bf16.msra.mxu0 0
    %155 = vmatpush.bf16.msra.mxu0 0
    %156 = vmatpush.bf16.msra.mxu0 0
    %157 = vmatpush.bf16.msra.mxu0 0
    %158 = vmatpush.bf16.msra.mxu0 0
    %159 = vmatpush.bf16.msra.mxu0 0
    %160 = vmatpush.bf16.msra.mxu0 %v126
    %161 = vmatpush.bf16.msra.mxu0 %v122
    %162 = vmatmul.bf16.gmra.mxu0 %v139
    %v163 = vpop.f32.mrf.mxu0
    %v164 = vadd.f32 %v90, %v163
    %v165 = vpop.f32.mrf.mxu0
    %166 = vdwg.mxu0
    %167 = vmatpush.bf16.msra.mxu0 0
    %168 = vmatpush.bf16.msra.mxu0 0
    %169 = vmatpush.bf16.msra.mxu0 0
    %170 = vmatpush.bf16.msra.mxu0 0
    %171 = vmatpush.bf16.msra.mxu0 0
    %172 = vmatpush.bf16.msra.mxu0 0
    %173 = vmatpush.bf16.msra.mxu0 %v127
    %174 = vmatpush.bf16.msra.mxu0 %v123
    %175 = vmatmul.bf16.gmra.mxu0 %v139
    %v176 = vpop.f32.mrf.mxu0
    %v177 = vadd.f32 %v91, %v176
    %v178 = vpop.f32.mrf.mxu0
    %179 = vdwg.mxu0
    %180 = vmatpush.bf16.msra.mxu0 0
    %181 = vmatpush.bf16.msra.mxu0 0
    %182 = vmatpush.bf16.msra.mxu0 0
    %183 = vmatpush.bf16.msra.mxu0 0
    %184 = vmatpush.bf16.msra.mxu0 0
    %185 = vmatpush.bf16.msra.mxu0 0
    %186 = vmatpush.bf16.msra.mxu0 %v128
    %187 = vmatpush.bf16.msra.mxu0 %v124
    %188 = vmatmul.bf16.gmra.mxu0 %v139
    %v189 = vpop.f32.mrf.mxu0
    %v190 = vadd.f32 %v92, %v189
    %v191 = vpop.f32.mrf.mxu0
    %192 = vdwg.mxu0
    %v193 = vmax.f32 %v151, 0.0
    %v194 = vmax.f32 %v164, 0.0
    %v195 = vmax.f32 %v177, 0.0
    %v196 = vmax.f32 %v190, 0.0
    %v197 = vpack.c.bf16 %v193, %v193
    %v198 = vpack.c.bf16 %v194, %v194
    %v199 = vpack.c.bf16 %v195, %v195
    %v200 = vpack.c.bf16 %v196, %v196
    %v201 = vld [vmem:[#allocation2] sm:$0xff]
    %v202 = vld [vmem:[#allocation2 + $0x8] sm:$0xff]
    %v203 = vld [vmem:[#allocation2 + $0x10] sm:$0xff]
    %v204 = vld [vmem:[#allocation2 + $0x18] sm:$0xff]
    %v205 = vld [vmem:[#allocation2 + $0x20] sm:$0xff]
    %v206 = vld [vmem:[#allocation2 + $0x28] sm:$0xff]
    %v207 = vld [vmem:[#allocation2 + $0x30] sm:$0xff]
    %v208 = vld [vmem:[#allocation2 + $0x38] sm:$0xff]
    %v209 = vld [vmem:[#allocation2 + $0x40] sm:$0xff]
    %v210 = vld [vmem:[#allocation2 + $0x48] sm:$0xff]
    %v211 = vld [vmem:[#allocation2 + $0x50] sm:$0xff]
    %v212 = vld [vmem:[#allocation2 + $0x58] sm:$0xff]
    %v213 = vld [vmem:[#allocation2 + $0x60] sm:$0xff]
    %v214 = vld [vmem:[#allocation2 + $0x68] sm:$0xff]
    %v215 = vld [vmem:[#allocation2 + $0x70] sm:$0xff]
    %v216 = vld [vmem:[#allocation2 + $0x78] sm:$0xff]
    %v217 = vld [vmem:[#allocation2 + $0x80] sm:$0xff]
    %v218 = vld [vmem:[#allocation2 + $0x88] sm:$0xff]
    %v219 = vld [vmem:[#allocation2 + $0x90] sm:$0xff]
    %v220 = vld [vmem:[#allocation2 + $0x98] sm:$0xff]
    %v221 = vld [vmem:[#allocation2 + $0xa0] sm:$0xff]
    %v222 = vld [vmem:[#allocation2 + $0xa8] sm:$0xff]
    %v223 = vld [vmem:[#allocation2 + $0xb0] sm:$0xff]
    %v224 = vld [vmem:[#allocation2 + $0xb8] sm:$0xff]
    %v225 = vld [vmem:[#allocation2 + $0xc0] sm:$0xff]
    %v226 = vld [vmem:[#allocation2 + $0xc8] sm:$0xff]
    %v227 = vld [vmem:[#allocation2 + $0xd0] sm:$0xff]
    %v228 = vld [vmem:[#allocation2 + $0xd8] sm:$0xff]
    %v229 = vld [vmem:[#allocation2 + $0xe0] sm:$0xff]
    %v230 = vld [vmem:[#allocation2 + $0xe8] sm:$0xff]
    %v231 = vld [vmem:[#allocation2 + $0xf0] sm:$0xff]
    %v232 = vld [vmem:[#allocation2 + $0xf8] sm:$0xff]
    %v233 = vld [vmem:[#allocation2 + $0x100] sm:$0xff]
    %v234 = vld [vmem:[#allocation2 + $0x108] sm:$0xff]
    %v235 = vld [vmem:[#allocation2 + $0x110] sm:$0xff]
    %v236 = vld [vmem:[#allocation2 + $0x118] sm:$0xff]
    %v237 = vld [vmem:[#allocation2 + $0x120] sm:$0xff]
    %v238 = vld [vmem:[#allocation2 + $0x128] sm:$0xff]
    %v239 = vld [vmem:[#allocation2 + $0x130] sm:$0xff]
    %v240 = vld [vmem:[#allocation2 + $0x138] sm:$0xff]
    %v241 = vld [vmem:[#allocation2 + $0x140] sm:$0xff]
    %v242 = vld [vmem:[#allocation2 + $0x148] sm:$0xff]
    %v243 = vld [vmem:[#allocation2 + $0x150] sm:$0xff]
    %v244 = vld [vmem:[#allocation2 + $0x158] sm:$0xff]
    %v245 = vld [vmem:[#allocation2 + $0x160] sm:$0xff]
    %v246 = vld [vmem:[#allocation2 + $0x168] sm:$0xff]
    %v247 = vld [vmem:[#allocation2 + $0x170] sm:$0xff]
    %v248 = vld [vmem:[#allocation2 + $0x178] sm:$0xff]
    %v249 = vld [vmem:[#allocation2 + $0x180] sm:$0xff]
    %v250 = vld [vmem:[#allocation2 + $0x188] sm:$0xff]
    %v251 = vld [vmem:[#allocation2 + $0x190] sm:$0xff]
    %v252 = vld [vmem:[#allocation2 + $0x198] sm:$0xff]
    %v253 = vld [vmem:[#allocation2 + $0x1a0] sm:$0xff]
    %v254 = vld [vmem:[#allocation2 + $0x1a8] sm:$0xff]
    %v255 = vld [vmem:[#allocation2 + $0x1b0] sm:$0xff]
    %v256 = vld [vmem:[#allocation2 + $0x1b8] sm:$0xff]
    %v257 = vld [vmem:[#allocation2 + $0x1c0] sm:$0xff]
    %v258 = vld [vmem:[#allocation2 + $0x1c8] sm:$0xff]
    %v259 = vld [vmem:[#allocation2 + $0x1d0] sm:$0xff]
    %v260 = vld [vmem:[#allocation2 + $0x1d8] sm:$0xff]
    %v261 = vld [vmem:[#allocation2 + $0x1e0] sm:$0xff]
    %v262 = vld [vmem:[#allocation2 + $0x1e8] sm:$0xff]
    %v263 = vld [vmem:[#allocation2 + $0x1f0] sm:$0xff]
    %v264 = vld [vmem:[#allocation2 + $0x1f8] sm:$0xff]
    %v265 = vld [vmem:[%s7] sm:$0x3]
    %v267 = vperm.slane %v265, 0
    %v268 = vperm.slane %v265, 1
    %v335 = vunpack.c.l.b16 %v201
    %v336 = vunpack.c.h.b16 %v201
    %v337 = vunpack.c.l.b16 %v202
    %v338 = vunpack.c.h.b16 %v202
    %v339 = vunpack.c.l.b16 %v203
    %v340 = vunpack.c.h.b16 %v203
    %v341 = vunpack.c.l.b16 %v204
    %v342 = vunpack.c.h.b16 %v204
    %v343 = vunpack.c.l.b16 %v205
    %v344 = vunpack.c.h.b16 %v205
    %v345 = vunpack.c.l.b16 %v206
    %v346 = vunpack.c.h.b16 %v206
    %v347 = vunpack.c.l.b16 %v207
    %v348 = vunpack.c.h.b16 %v207
    %v349 = vunpack.c.l.b16 %v208
    %v350 = vunpack.c.h.b16 %v208
    %v351 = vunpack.c.l.b16 %v209
    %v352 = vunpack.c.h.b16 %v209
    %v353 = vunpack.c.l.b16 %v210
    %v354 = vunpack.c.h.b16 %v210
    %v355 = vunpack.c.l.b16 %v211
    %v356 = vunpack.c.h.b16 %v211
    %v357 = vunpack.c.l.b16 %v212
    %v358 = vunpack.c.h.b16 %v212
    %v359 = vunpack.c.l.b16 %v213
    %v360 = vunpack.c.h.b16 %v213
    %v361 = vunpack.c.l.b16 %v214
    %v362 = vunpack.c.h.b16 %v214
    %v363 = vunpack.c.l.b16 %v215
    %v364 = vunpack.c.h.b16 %v215
    %v365 = vunpack.c.l.b16 %v216
    %v366 = vunpack.c.h.b16 %v216
    %v367 = vunpack.c.l.b16 %v217
    %v368 = vunpack.c.h.b16 %v217
    %v369 = vunpack.c.l.b16 %v218
    %v370 = vunpack.c.h.b16 %v218
    %v371 = vunpack.c.l.b16 %v219
    %v372 = vunpack.c.h.b16 %v219
    %v373 = vunpack.c.l.b16 %v220
    %v374 = vunpack.c.h.b16 %v220
    %v375 = vunpack.c.l.b16 %v221
    %v376 = vunpack.c.h.b16 %v221
    %v377 = vunpack.c.l.b16 %v222
    %v378 = vunpack.c.h.b16 %v222
    %v379 = vunpack.c.l.b16 %v223
    %v380 = vunpack.c.h.b16 %v223
    %v381 = vunpack.c.l.b16 %v224
    %v382 = vunpack.c.h.b16 %v224
    %v383 = vunpack.c.l.b16 %v225
    %v384 = vunpack.c.h.b16 %v225
    %v385 = vunpack.c.l.b16 %v226
    %v386 = vunpack.c.h.b16 %v226
    %v387 = vunpack.c.l.b16 %v227
    %v388 = vunpack.c.h.b16 %v227
    %v389 = vunpack.c.l.b16 %v228
    %v390 = vunpack.c.h.b16 %v228
    %v391 = vunpack.c.l.b16 %v229
    %v392 = vunpack.c.h.b16 %v229
    %v393 = vunpack.c.l.b16 %v230
    %v394 = vunpack.c.h.b16 %v230
    %v395 = vunpack.c.l.b16 %v231
    %v396 = vunpack.c.h.b16 %v231
    %v397 = vunpack.c.l.b16 %v232
    %v398 = vunpack.c.h.b16 %v232
    %v399 = vunpack.c.l.b16 %v233
    %v400 = vunpack.c.h.b16 %v233
    %v401 = vunpack.c.l.b16 %v234
    %v402 = vunpack.c.h.b16 %v234
    %v403 = vunpack.c.l.b16 %v235
    %v404 = vunpack.c.h.b16 %v235
    %v405 = vunpack.c.l.b16 %v236
    %v406 = vunpack.c.h.b16 %v236
    %v407 = vunpack.c.l.b16 %v237
    %v408 = vunpack.c.h.b16 %v237
    %v409 = vunpack.c.l.b16 %v238
    %v410 = vunpack.c.h.b16 %v238
    %v411 = vunpack.c.l.b16 %v239
    %v412 = vunpack.c.h.b16 %v239
    %v413 = vunpack.c.l.b16 %v240
    %v414 = vunpack.c.h.b16 %v240
    %v415 = vunpack.c.l.b16 %v241
    %v416 = vunpack.c.h.b16 %v241
    %v417 = vunpack.c.l.b16 %v242
    %v418 = vunpack.c.h.b16 %v242
    %v419 = vunpack.c.l.b16 %v243
    %v420 = vunpack.c.h.b16 %v243
    %v421 = vunpack.c.l.b16 %v244
    %v422 = vunpack.c.h.b16 %v244
    %v423 = vunpack.c.l.b16 %v245
    %v424 = vunpack.c.h.b16 %v245
    %v425 = vunpack.c.l.b16 %v246
    %v426 = vunpack.c.h.b16 %v246
    %v427 = vunpack.c.l.b16 %v247
    %v428 = vunpack.c.h.b16 %v247
    %v429 = vunpack.c.l.b16 %v248
    %v430 = vunpack.c.h.b16 %v248
    %v431 = vunpack.c.l.b16 %v249
    %v432 = vunpack.c.h.b16 %v249
    %v433 = vunpack.c.l.b16 %v250
    %v434 = vunpack.c.h.b16 %v250
    %v435 = vunpack.c.l.b16 %v251
    %v436 = vunpack.c.h.b16 %v251
    %v437 = vunpack.c.l.b16 %v252
    %v438 = vunpack.c.h.b16 %v252
    %v439 = vunpack.c.l.b16 %v253
    %v440 = vunpack.c.h.b16 %v253
    %v441 = vunpack.c.l.b16 %v254
    %v442 = vunpack.c.h.b16 %v254
    %v443 = vunpack.c.l.b16 %v255
    %v444 = vunpack.c.h.b16 %v255
    %v445 = vunpack.c.l.b16 %v256
    %v446 = vunpack.c.h.b16 %v256
    %v447 = vunpack.c.l.b16 %v257
    %v448 = vunpack.c.h.b16 %v257
    %v449 = vunpack.c.l.b16 %v258
    %v450 = vunpack.c.h.b16 %v258
    %v451 = vunpack.c.l.b16 %v259
    %v452 = vunpack.c.h.b16 %v259
    %v453 = vunpack.c.l.b16 %v260
    %v454 = vunpack.c.h.b16 %v260
    %v455 = vunpack.c.l.b16 %v261
    %v456 = vunpack.c.h.b16 %v261
    %v457 = vunpack.c.l.b16 %v262
    %v458 = vunpack.c.h.b16 %v262
    %v459 = vunpack.c.l.b16 %v263
    %v460 = vunpack.c.h.b16 %v263
    %v461 = vunpack.c.l.b16 %v264
    %v462 = vunpack.c.h.b16 %v264
    %v463 = vpack.c.b16 %v337, %v335
    %v464 = vpack.c.b16 %v338, %v336
    %v465 = vpack.c.b16 %v341, %v339
    %v466 = vpack.c.b16 %v342, %v340
    %v467 = vpack.c.b16 %v345, %v343
    %v468 = vpack.c.b16 %v346, %v344
    %v469 = vpack.c.b16 %v349, %v347
    %v470 = vpack.c.b16 %v350, %v348
    %v471 = vpack.c.b16 %v353, %v351
    %v472 = vpack.c.b16 %v354, %v352
    %v473 = vpack.c.b16 %v357, %v355
    %v474 = vpack.c.b16 %v358, %v356
    %v475 = vpack.c.b16 %v361, %v359
    %v476 = vpack.c.b16 %v362, %v360
    %v477 = vpack.c.b16 %v365, %v363
    %v478 = vpack.c.b16 %v366, %v364
    %v479 = vpack.c.b16 %v369, %v367
    %v480 = vpack.c.b16 %v370, %v368
    %v481 = vpack.c.b16 %v373, %v371
    %v482 = vpack.c.b16 %v374, %v372
    %v483 = vpack.c.b16 %v377, %v375
    %v484 = vpack.c.b16 %v378, %v376
    %v485 = vpack.c.b16 %v381, %v379
    %v486 = vpack.c.b16 %v382, %v380
    %v487 = vpack.c.b16 %v385, %v383
    %v488 = vpack.c.b16 %v386, %v384
    %v489 = vpack.c.b16 %v389, %v387
    %v490 = vpack.c.b16 %v390, %v388
    %v491 = vpack.c.b16 %v393, %v391
    %v492 = vpack.c.b16 %v394, %v392
    %v493 = vpack.c.b16 %v397, %v395
    %v494 = vpack.c.b16 %v398, %v396
    %v495 = vpack.c.b16 %v401, %v399
    %v496 = vpack.c.b16 %v402, %v400
    %v497 = vpack.c.b16 %v405, %v403
    %v498 = vpack.c.b16 %v406, %v404
    %v499 = vpack.c.b16 %v409, %v407
    %v500 = vpack.c.b16 %v410, %v408
    %v501 = vpack.c.b16 %v413, %v411
    %v502 = vpack.c.b16 %v414, %v412
    %v503 = vpack.c.b16 %v417, %v415
    %v504 = vpack.c.b16 %v418, %v416
    %v505 = vpack.c.b16 %v421, %v419
    %v506 = vpack.c.b16 %v422, %v420
    %v507 = vpack.c.b16 %v425, %v423
    %v508 = vpack.c.b16 %v426, %v424
    %v509 = vpack.c.b16 %v429, %v427
    %v510 = vpack.c.b16 %v430, %v428
    %v511 = vpack.c.b16 %v433, %v431
    %v512 = vpack.c.b16 %v434, %v432
    %v513 = vpack.c.b16 %v437, %v435
    %v514 = vpack.c.b16 %v438, %v436
    %v515 = vpack.c.b16 %v441, %v439
    %v516 = vpack.c.b16 %v442, %v440
    %v517 = vpack.c.b16 %v445, %v443
    %v518 = vpack.c.b16 %v446, %v444
    %v519 = vpack.c.b16 %v449, %v447
    %v520 = vpack.c.b16 %v450, %v448
    %v521 = vpack.c.b16 %v453, %v451
    %v522 = vpack.c.b16 %v454, %v452
    %v523 = vpack.c.b16 %v457, %v455
    %v524 = vpack.c.b16 %v458, %v456
    %v525 = vpack.c.b16 %v461, %v459
    %v526 = vpack.c.b16 %v462, %v460
    %591 = vmatpush.bf16.msra.mxu0 %v477
    %592 = vmatpush.bf16.msra.mxu0 %v475
    %593 = vmatpush.bf16.msra.mxu0 %v473
    %594 = vmatpush.bf16.msra.mxu0 %v471
    %595 = vmatpush.bf16.msra.mxu0 %v469
    %596 = vmatpush.bf16.msra.mxu0 %v467
    %597 = vmatpush.bf16.msra.mxu0 %v465
    %598 = vmatpush.bf16.msra.mxu0 %v463
    %599 = vmatmul.bf16.gmra.mxu0 %v197
    %v600 = vpop.f32.mrf.mxu0
    %v601 = vadd.f32 %v267, %v600
    %v602 = vpop.f32.mrf.mxu0
    %603 = vdwg.mxu0
    %604 = vmatpush.bf16.msra.mxu0 %v493
    %605 = vmatpush.bf16.msra.mxu0 %v491
    %606 = vmatpush.bf16.msra.mxu0 %v489
    %607 = vmatpush.bf16.msra.mxu0 %v487
    %608 = vmatpush.bf16.msra.mxu0 %v485
    %609 = vmatpush.bf16.msra.mxu0 %v483
    %610 = vmatpush.bf16.msra.mxu0 %v481
    %611 = vmatpush.bf16.msra.mxu0 %v479
    %612 = vmatmul.bf16.gmra.mxu0 %v198
    %v613 = vpop.f32.mrf.mxu0
    %v614 = vadd.f32 %v601, %v613
    %v615 = vpop.f32.mrf.mxu0
    %616 = vdwg.mxu0
    %617 = vmatpush.bf16.msra.mxu0 %v509
    %618 = vmatpush.bf16.msra.mxu0 %v507
    %619 = vmatpush.bf16.msra.mxu0 %v505
    %620 = vmatpush.bf16.msra.mxu0 %v503
    %621 = vmatpush.bf16.msra.mxu0 %v501
    %622 = vmatpush.bf16.msra.mxu0 %v499
    %623 = vmatpush.bf16.msra.mxu0 %v497
    %624 = vmatpush.bf16.msra.mxu0 %v495
    %625 = vmatmul.bf16.gmra.mxu0 %v199
    %v626 = vpop.f32.mrf.mxu0
    %v627 = vadd.f32 %v614, %v626
    %v628 = vpop.f32.mrf.mxu0
    %629 = vdwg.mxu0
    %630 = vmatpush.bf16.msra.mxu0 %v525
    %631 = vmatpush.bf16.msra.mxu0 %v523
    %632 = vmatpush.bf16.msra.mxu0 %v521
    %633 = vmatpush.bf16.msra.mxu0 %v519
    %634 = vmatpush.bf16.msra.mxu0 %v517
    %635 = vmatpush.bf16.msra.mxu0 %v515
    %636 = vmatpush.bf16.msra.mxu0 %v513
    %637 = vmatpush.bf16.msra.mxu0 %v511
    %638 = vmatmul.bf16.gmra.mxu0 %v200
    %v639 = vpop.f32.mrf.mxu0
    %v640 = vadd.f32 %v627, %v639
    %v641 = vpop.f32.mrf.mxu0
    %642 = vdwg.mxu0
    %643 = vmatpush.bf16.msra.mxu0 %v478
    %644 = vmatpush.bf16.msra.mxu0 %v476
    %645 = vmatpush.bf16.msra.mxu0 %v474
    %646 = vmatpush.bf16.msra.mxu0 %v472
    %647 = vmatpush.bf16.msra.mxu0 %v470
    %648 = vmatpush.bf16.msra.mxu0 %v468
    %649 = vmatpush.bf16.msra.mxu0 %v466
    %650 = vmatpush.bf16.msra.mxu0 %v464
    %651 = vmatmul.bf16.gmra.mxu0 %v197
    %v652 = vpop.f32.mrf.mxu0
    %v653 = vadd.f32 %v268, %v652
    %v654 = vpop.f32.mrf.mxu0
    %655 = vdwg.mxu0
    %656 = vmatpush.bf16.msra.mxu0 %v494
    %657 = vmatpush.bf16.msra.mxu0 %v492
    %658 = vmatpush.bf16.msra.mxu0 %v490
    %659 = vmatpush.bf16.msra.mxu0 %v488
    %660 = vmatpush.bf16.msra.mxu0 %v486
    %661 = vmatpush.bf16.msra.mxu0 %v484
    %662 = vmatpush.bf16.msra.mxu0 %v482
    %663 = vmatpush.bf16.msra.mxu0 %v480
    %664 = vmatmul.bf16.gmra.mxu0 %v198
    %v665 = vpop.f32.mrf.mxu0
    %v666 = vadd.f32 %v653, %v665
    %v667 = vpop.f32.mrf.mxu0
    %668 = vdwg.mxu0
    %669 = vmatpush.bf16.msra.mxu0 %v510
    %670 = vmatpush.bf16.msra.mxu0 %v508
    %671 = vmatpush.bf16.msra.mxu0 %v506
    %672 = vmatpush.bf16.msra.mxu0 %v504
    %673 = vmatpush.bf16.msra.mxu0 %v502
    %674 = vmatpush.bf16.msra.mxu0 %v500
    %675 = vmatpush.bf16.msra.mxu0 %v498
    %676 = vmatpush.bf16.msra.mxu0 %v496
    %677 = vmatmul.bf16.gmra.mxu0 %v199
    %v678 = vpop.f32.mrf.mxu0
    %v679 = vadd.f32 %v666, %v678
    %v680 = vpop.f32.mrf.mxu0
    %681 = vdwg.mxu0
    %682 = vmatpush.bf16.msra.mxu0 %v526
    %683 = vmatpush.bf16.msra.mxu0 %v524
    %684 = vmatpush.bf16.msra.mxu0 %v522
    %685 = vmatpush.bf16.msra.mxu0 %v520
    %686 = vmatpush.bf16.msra.mxu0 %v518
    %687 = vmatpush.bf16.msra.mxu0 %v516
    %688 = vmatpush.bf16.msra.mxu0 %v514
    %689 = vmatpush.bf16.msra.mxu0 %v512
    %690 = vmatmul.bf16.gmra.mxu0 %v200
    %v691 = vpop.f32.mrf.mxu0
    %v692 = vadd.f32 %v679, %v691
    %v693 = vpop.f32.mrf.mxu0
    %694 = vdwg.mxu0
    %v695 = vmax.f32 %v640, 0.0
    %v696 = vmax.f32 %v692, 0.0
    %v697 = vpack.c.bf16 %v695, %v695
    %v698 = vpack.c.bf16 %v696, %v696
    %v699 = vld [vmem:[#allocation5] sm:$0xf]
    %v700 = vld [vmem:[#allocation5 + $0x4] sm:$0xf]
    %v701 = vld [vmem:[#allocation5 + $0x8] sm:$0xf]
    %v702 = vld [vmem:[#allocation5 + $0xc] sm:$0xf]
    %v703 = vld [vmem:[#allocation5 + $0x10] sm:$0xf]
    %v704 = vld [vmem:[#allocation5 + $0x14] sm:$0xf]
    %v705 = vld [vmem:[#allocation5 + $0x18] sm:$0xf]
    %v706 = vld [vmem:[#allocation5 + $0x1c] sm:$0xf]
    %v707 = vld [vmem:[#allocation5 + $0x20] sm:$0xf]
    %v708 = vld [vmem:[#allocation5 + $0x24] sm:$0xf]
    %v709 = vld [vmem:[#allocation5 + $0x28] sm:$0xf]
    %v710 = vld [vmem:[#allocation5 + $0x2c] sm:$0xf]
    %v711 = vld [vmem:[#allocation5 + $0x30] sm:$0xf]
    %v712 = vld [vmem:[#allocation5 + $0x34] sm:$0xf]
    %v713 = vld [vmem:[#allocation5 + $0x38] sm:$0xf]
    %v714 = vld [vmem:[#allocation5 + $0x3c] sm:$0xf]
    %v715 = vld [vmem:[#allocation5 + $0x40] sm:$0xf]
    %v716 = vld [vmem:[#allocation5 + $0x44] sm:$0xf]
    %v717 = vld [vmem:[#allocation5 + $0x48] sm:$0xf]
    %v718 = vld [vmem:[#allocation5 + $0x4c] sm:$0xf]
    %v719 = vld [vmem:[#allocation5 + $0x50] sm:$0xf]
    %v720 = vld [vmem:[#allocation5 + $0x54] sm:$0xf]
    %v721 = vld [vmem:[#allocation5 + $0x58] sm:$0xf]
    %v722 = vld [vmem:[#allocation5 + $0x5c] sm:$0xf]
    %v723 = vld [vmem:[#allocation5 + $0x60] sm:$0xf]
    %v724 = vld [vmem:[#allocation5 + $0x64] sm:$0xf]
    %v725 = vld [vmem:[#allocation5 + $0x68] sm:$0xf]
    %v726 = vld [vmem:[#allocation5 + $0x6c] sm:$0xf]
    %v727 = vld [vmem:[#allocation5 + $0x70] sm:$0xf]
    %v728 = vld [vmem:[#allocation5 + $0x74] sm:$0xf]
    %v729 = vld [vmem:[#allocation5 + $0x78] sm:$0xf]
    %v730 = vld [vmem:[#allocation5 + $0x7c] sm:$0xf]
    %v731 = vld [vmem:[%s8] sm:$0x1]
    %v733 = vperm.slane %v731, 0
    %v767 = vunpack.c.l.b16 %v699
    %v768 = vunpack.c.l.b16 %v700
    %v769 = vunpack.c.l.b16 %v701
    %v770 = vunpack.c.l.b16 %v702
    %v771 = vunpack.c.l.b16 %v703
    %v772 = vunpack.c.l.b16 %v704
    %v773 = vunpack.c.l.b16 %v705
    %v774 = vunpack.c.l.b16 %v706
    %v775 = vunpack.c.l.b16 %v707
    %v776 = vunpack.c.l.b16 %v708
    %v777 = vunpack.c.l.b16 %v709
    %v778 = vunpack.c.l.b16 %v710
    %v779 = vunpack.c.l.b16 %v711
    %v780 = vunpack.c.l.b16 %v712
    %v781 = vunpack.c.l.b16 %v713
    %v782 = vunpack.c.l.b16 %v714
    %v783 = vunpack.c.l.b16 %v715
    %v784 = vunpack.c.l.b16 %v716
    %v785 = vunpack.c.l.b16 %v717
    %v786 = vunpack.c.l.b16 %v718
    %v787 = vunpack.c.l.b16 %v719
    %v788 = vunpack.c.l.b16 %v720
    %v789 = vunpack.c.l.b16 %v721
    %v790 = vunpack.c.l.b16 %v722
    %v791 = vunpack.c.l.b16 %v723
    %v792 = vunpack.c.l.b16 %v724
    %v793 = vunpack.c.l.b16 %v725
    %v794 = vunpack.c.l.b16 %v726
    %v795 = vunpack.c.l.b16 %v727
    %v796 = vunpack.c.l.b16 %v728
    %v797 = vunpack.c.l.b16 %v729
    %v798 = vunpack.c.l.b16 %v730
    %v799 = vpack.c.b16 %v768, %v767
    %v800 = vpack.c.b16 %v770, %v769
    %v801 = vpack.c.b16 %v772, %v771
    %v802 = vpack.c.b16 %v774, %v773
    %v803 = vpack.c.b16 %v776, %v775
    %v804 = vpack.c.b16 %v778, %v777
    %v805 = vpack.c.b16 %v780, %v779
    %v806 = vpack.c.b16 %v782, %v781
    %v807 = vpack.c.b16 %v784, %v783
    %v808 = vpack.c.b16 %v786, %v785
    %v809 = vpack.c.b16 %v788, %v787
    %v810 = vpack.c.b16 %v790, %v789
    %v811 = vpack.c.b16 %v792, %v791
    %v812 = vpack.c.b16 %v794, %v793
    %v813 = vpack.c.b16 %v796, %v795
    %v814 = vpack.c.b16 %v798, %v797
    %831 = vmatpush.bf16.msra.mxu0 %v806
    %832 = vmatpush.bf16.msra.mxu0 %v805
    %833 = vmatpush.bf16.msra.mxu0 %v804
    %834 = vmatpush.bf16.msra.mxu0 %v803
    %835 = vmatpush.bf16.msra.mxu0 %v802
    %836 = vmatpush.bf16.msra.mxu0 %v801
    %837 = vmatpush.bf16.msra.mxu0 %v800
    %838 = vmatpush.bf16.msra.mxu0 %v799
    %839 = vmatmul.bf16.gmra.mxu0 %v697
    %v840 = vpop.f32.mrf.mxu0
    %v841 = vadd.f32 %v733, %v840
    %v842 = vpop.f32.mrf.mxu0
    %843 = vdwg.mxu0
    %844 = vmatpush.bf16.msra.mxu0 %v814
    %845 = vmatpush.bf16.msra.mxu0 %v813
    %846 = vmatpush.bf16.msra.mxu0 %v812
    %847 = vmatpush.bf16.msra.mxu0 %v811
    %848 = vmatpush.bf16.msra.mxu0 %v810
    %849 = vmatpush.bf16.msra.mxu0 %v809
    %850 = vmatpush.bf16.msra.mxu0 %v808
    %851 = vmatpush.bf16.msra.mxu0 %v807
    %852 = vmatmul.bf16.gmra.mxu0 %v698
    %v853 = vpop.f32.mrf.mxu0
    %v854 = vadd.f32 %v841, %v853
    %v855 = vpop.f32.mrf.mxu0
    %856 = vdwg.mxu0
    %v857 = vmax.f32 %v854, 0.0
    %v858 = vpack.c.bf16 %v857, %v857
    %v859 = vld [vmem:[%s5] sm:$0xf]
    %v860 = vld [vmem:[%s5 + $0x4] sm:$0xf]
    %v861 = vld [vmem:[%s5 + $0x8] sm:$0xf]
    %v862 = vld [vmem:[%s5 + $0xc] sm:$0xf]
    %v863 = vld [vmem:[%s5 + $0x10] sm:$0xf]
    %v864 = vld [vmem:[%s5 + $0x14] sm:$0xf]
    %v865 = vld [vmem:[%s5 + $0x18] sm:$0xf]
    %v866 = vld [vmem:[%s5 + $0x1c] sm:$0xf]
    %v867 = vld [vmem:[%s5 + $0x20] sm:$0xf]
    %v868 = vld [vmem:[%s5 + $0x24] sm:$0xf]
    %v869 = vld [vmem:[%s5 + $0x28] sm:$0xf]
    %v870 = vld [vmem:[%s5 + $0x2c] sm:$0xf]
    %v871 = vld [vmem:[%s5 + $0x30] sm:$0xf]
    %v872 = vld [vmem:[%s5 + $0x34] sm:$0xf]
    %v873 = vld [vmem:[%s5 + $0x38] sm:$0xf]
    %v874 = vld [vmem:[%s5 + $0x3c] sm:$0xf]
    %v875 = vld [vmem:[%s9] sm:$0x1]
    %v877 = vperm.slane %v875, 0
    %v895 = vunpack.c.l.b16 %v859
    %v896 = vunpack.c.l.b16 %v860
    %v897 = vunpack.c.l.b16 %v861
    %v898 = vunpack.c.l.b16 %v862
    %v899 = vunpack.c.l.b16 %v863
    %v900 = vunpack.c.l.b16 %v864
    %v901 = vunpack.c.l.b16 %v865
    %v902 = vunpack.c.l.b16 %v866
    %v903 = vunpack.c.l.b16 %v867
    %v904 = vunpack.c.l.b16 %v868
    %v905 = vunpack.c.l.b16 %v869
    %v906 = vunpack.c.l.b16 %v870
    %v907 = vunpack.c.l.b16 %v871
    %v908 = vunpack.c.l.b16 %v872
    %v909 = vunpack.c.l.b16 %v873
    %v910 = vunpack.c.l.b16 %v874
    %v911 = vpack.c.b16 %v896, %v895
    %v912 = vpack.c.b16 %v898, %v897
    %v913 = vpack.c.b16 %v900, %v899
    %v914 = vpack.c.b16 %v902, %v901
    %v915 = vpack.c.b16 %v904, %v903
    %v916 = vpack.c.b16 %v906, %v905
    %v917 = vpack.c.b16 %v908, %v907
    %v918 = vpack.c.b16 %v910, %v909
    %927 = vmatpush.bf16.msra.mxu0 %v918
    %928 = vmatpush.bf16.msra.mxu0 %v917
    %929 = vmatpush.bf16.msra.mxu0 %v916
    %930 = vmatpush.bf16.msra.mxu0 %v915
    %931 = vmatpush.bf16.msra.mxu0 %v914
    %932 = vmatpush.bf16.msra.mxu0 %v913
    %933 = vmatpush.bf16.msra.mxu0 %v912
    %934 = vmatpush.bf16.msra.mxu0 %v911
    %935 = vmatmul.bf16.gmra.mxu0 %v858
    %v936 = vpop.f32.mrf.mxu0
    %v937 = vadd.f32 %v877, %v936
    %v938 = vpop.f32.mrf.mxu0
    %939 = vdwg.mxu0
    %v940 = vmax.f32 %v937, 0.0
    %v941 = vpack.c.bf16 %v940, %v940
    %v942 = vld [vmem:[%s6] sm:$0xf]
    %v943 = vld [vmem:[%s6 + $0x4] sm:$0xf]
    %v944 = vld [vmem:[%s6 + $0x8] sm:$0xf]
    %v945 = vld [vmem:[%s6 + $0xc] sm:$0xf]
    %v946 = vld [vmem:[%s6 + $0x10] sm:$0xf]
    %v947 = vld [vmem:[%s6 + $0x14] sm:$0xf]
    %v948 = vld [vmem:[%s6 + $0x18] sm:$0xf]
    %v949 = vld [vmem:[%s6 + $0x1c] sm:$0xf]
    %v950 = vld [vmem:[%s10] sm:$0x1]
    %v952 = vperm.slane %v950, 0
    %v962 = vunpack.c.l.b16 %v942
    %v963 = vunpack.c.l.b16 %v943
    %v964 = vunpack.c.l.b16 %v944
    %v965 = vunpack.c.l.b16 %v945
    %v966 = vunpack.c.l.b16 %v946
    %v967 = vunpack.c.l.b16 %v947
    %v968 = vunpack.c.l.b16 %v948
    %v969 = vunpack.c.l.b16 %v949
    %v970 = vpack.c.b16 %v963, %v962
    %v971 = vpack.c.b16 %v965, %v964
    %v972 = vpack.c.b16 %v967, %v966
    %v973 = vpack.c.b16 %v969, %v968
    %vm978 = vcmask 523264
    %v980 = vsel %vm978, %v941, 0
    %982 = vmatpush.bf16.msra.mxu0 0
    %983 = vmatpush.bf16.msra.mxu0 0
    %984 = vmatpush.bf16.msra.mxu0 0
    %985 = vmatpush.bf16.msra.mxu0 0
    %986 = vmatpush.bf16.msra.mxu0 %v973
    %987 = vmatpush.bf16.msra.mxu0 %v972
    %988 = vmatpush.bf16.msra.mxu0 %v971
    %989 = vmatpush.bf16.msra.mxu0 %v970
    %990 = vmatmul.bf16.gmra.mxu0 %v980
    %v991 = vpop.f32.mrf.mxu0
    %v992 = vadd.f32 %v952, %v991
    %v993 = vpop.f32.mrf.mxu0
    %994 = vdwg.mxu0
    %v995 = vmax.f32 %v992, 0.0
    %v996 = vpack.c.bf16 %v995, %v995
    %v997 = vld [vmem:[%s11] sm:$0xf]
    %v998 = vld [vmem:[%s11 + $0x4] sm:$0xf]
    %v999 = vld [vmem:[%s11 + $0x8] sm:$0xf]
    %v1000 = vld [vmem:[%s11 + $0xc] sm:$0xf]
    %v1001 = vld [vmem:[%s12] sm:$0x1]
    %v1003 = vperm.slane %v1001, 0
    %v1009 = vunpack.c.l.b16 %v997
    %v1010 = vunpack.c.l.b16 %v998
    %v1011 = vunpack.c.l.b16 %v999
    %v1012 = vunpack.c.l.b16 %v1000
    %v1013 = vpack.c.b16 %v1010, %v1009
    %v1014 = vpack.c.b16 %v1012, %v1011
    %v1018 = vsel %vm137, %v996, 0
    %1020 = vmatpush.bf16.msra.mxu0 0
    %1021 = vmatpush.bf16.msra.mxu0 0
    %1022 = vmatpush.bf16.msra.mxu0 0
    %1023 = vmatpush.bf16.msra.mxu0 0
    %1024 = vmatpush.bf16.msra.mxu0 0
    %1025 = vmatpush.bf16.msra.mxu0 0
    %1026 = vmatpush.bf16.msra.mxu0 %v1014
    %1027 = vmatpush.bf16.msra.mxu0 %v1013
    %1028 = vmatmul.bf16.gmra.mxu0 %v1018
    %v1029 = vpop.f32.mrf.mxu0
    %v1030 = vadd.f32 %v1003, %v1029
    %v1031 = vpop.f32.mrf.mxu0
    %1032 = vdwg.mxu0
    %1033 = vst [vmem:[#allocation7] sm:$0xff] %v1030
    // Predicated region
    $region62: #{tpu_custom_call.1} parent=1 // pred_check
      _
    $region63: #{tpu_custom_call.1} parent=1 // pred_check_branch
      %1035 = sbr.rel (0) target = $region65
    $region64: #{tpu_custom_call.1} parent=1 // pred_region
      %1037 = vsyncadd [#allocation4], 0
      %s1039 = sshll.u32 [#allocation7], 4
      %s1040 = int_to_ptr.vmem [resolvable:$true] %s1039
      %s1041 = sshll.u32 %s13, 4
      %s1042 = int_to_ptr.hbm [resolvable:$true] %s1041
      %1044 = dma.vmem_to_hbm [thread:$0]  %s1040, 128, %s1042, [#allocation4]
    $region65: #{tpu_custom_call.1} parent=1 // pred_fallthru
      _
    // Predicated region
    $region66: #{tpu_custom_call.1} parent=1 // pred_check
      _
    $region67: #{tpu_custom_call.1} parent=1 // pred_check_branch
      %1046 = sbr.rel (0) target = $region69
    $region68: #{tpu_custom_call.1} parent=1 // pred_region
      %1048 = dma.done [#allocation4], 128
    $region69: #{tpu_custom_call.1} parent=1 // pred_fallthru
      _
    %1049 = vsyncpa [#allocation3], 1
    %1050 = vsyncpa [#allocation6], 1
    %1051 = vsyncpa [#allocation4], 1

</llo_original>
